<compile_context>
chip_gen: v6e
topology: v6e:2x2x1
jax: 0.10.0
libtpu: 0.0.40
codegen_flags: <defaults>
</compile_context>

<pallas_src>
import jax
import jax.numpy as jnp
from jax.experimental import pallas as pl
from jax.experimental.pallas import tpu as pltpu

HIDDEN = 128


def _round_up(n, m):
    return ((n + m - 1) // m) * m


def qnet_kernel(x_ref, w1_ref, b1_ref, w2_ref, b2_ref, w3_ref, b3_ref, o_ref):
    # x is read as f32 straight from HBM and cast to bf16 on the VPU (ample
    # slack) so all three matmuls run as bf16 MXU passes with f32 accumulation.
    x = x_ref[...].astype(jnp.bfloat16)
    # fc1 + relu
    h1 = jnp.dot(x, w1_ref[...], preferred_element_type=jnp.float32)
    h1 = jnp.maximum(h1 + b1_ref[...], 0.0).astype(jnp.bfloat16)
    # fc2 + relu
    h2 = jnp.dot(h1, w2_ref[...], preferred_element_type=jnp.float32)
    h2 = jnp.maximum(h2 + b2_ref[...], 0.0).astype(jnp.bfloat16)
    # fc3 (no activation); bias added on the f32 accumulator.
    out = jnp.dot(h2, w3_ref[...], preferred_element_type=jnp.float32)
    o_ref[...] = (out + b3_ref[...]).astype(o_ref.dtype)


def prepare_params(params):
    """One-time parameter prep (call once, reuse across forward calls):
    weights cast to bf16; biases kept f32 with shape (1, out)."""
    w1, b1, w2, b2, w3, b3 = params
    return (w1.astype(jnp.bfloat16), b1,
            w2.astype(jnp.bfloat16), b2,
            w3.astype(jnp.bfloat16), b3)


def qnet_forward(x, prepared_params, *, block_batch=1024):
    """x: (batch, num_input) f32.  prepared_params: output of prepare_params()."""
    w1, b1, w2, b2, w3, b3 = prepared_params
    batch, num_input = x.shape
    actions = w3.shape[1]

    # Batch tile: sublane-aligned (16 rows for bf16 packing), capped at
    # block_batch (sweep 512..4096; larger on single-core v6e, keep the default
    # on v5e/v7x whose scoped VMEM is smaller), and chosen so the batch grid has
    # >= 2 steps whenever batch allows so the "parallel" axis can shard across
    # the two TensorCores on v7x.
    if batch > 16:
        tb = min(_round_up(block_batch, 16), _round_up(pl.cdiv(batch, 2), 16))
    else:
        tb = _round_up(batch, 8)
    n_blocks = pl.cdiv(batch, tb)  # ragged tail handled by Pallas (no jnp.pad)

    def resident(arr):
        # Whole array, same block index at every grid step -> DMA'd once and
        # kept VMEM-resident for the duration of the call.
        return pl.BlockSpec(arr.shape, lambda i: (0, 0))

    out = pl.pallas_call(
        qnet_kernel,
        # Unpadded output: (batch, actions) f32. Block spans the full last dim,
        # so the writeback DMA is contiguous and the HBM write stream is tiny.
        out_shape=jax.ShapeDtypeStruct((batch, actions), jnp.float32),
        grid=(n_blocks,),
        in_specs=[
            pl.BlockSpec((tb, num_input), lambda i: (i, 0)),  # x tiled over batch
            resident(w1), resident(b1),
            resident(w2), resident(b2),
            resident(w3), resident(b3),
        ],
        out_specs=pl.BlockSpec((tb, actions), lambda i: (i, 0)),
        compiler_params=pltpu.CompilerParams(
            dimension_semantics=("parallel",)),
    )(x, w1, b1, w2, b2, w3, b3)

    return out


def init_params(num_input, actions, key):
    # Deterministic init mimicking PyTorch's default Linear init
    # (uniform(-1/sqrt(fan_in), 1/sqrt(fan_in))). Weights stored as (in, out).
    ks = jax.random.split(key, 6)

    def linear(kw, kb, fan_in, fan_out):
        bound = 1.0 / jnp.sqrt(fan_in)
        w = jax.random.uniform(kw, (fan_in, fan_out), jnp.float32, -bound, bound)
        b = jax.random.uniform(kb, (1, fan_out), jnp.float32, -bound, bound)
        return w, b

    w1, b1 = linear(ks[0], ks[1], num_input, HIDDEN)
    w2, b2 = linear(ks[2], ks[3], HIDDEN, HIDDEN)
    w3, b3 = linear(ks[4], ks[5], HIDDEN, actions)
    return (w1, b1, w2, b2, w3, b3)


def qnet_reference(x, params):
    # f32 reference (kernel runs bf16 matmuls with f32 accumulation).
    w1, b1, w2, b2, w3, b3 = params
    h1 = jnp.maximum(x @ w1 + b1, 0.0)
    h2 = jnp.maximum(h1 @ w2 + b2, 0.0)
    return h2 @ w3 + b3


if __name__ == "__main__":
    key = jax.random.PRNGKey(0)
    kx, kp = jax.random.split(key)

    batch, num_input, actions = 32, 16, 4
    x = jax.random.normal(kx, (batch, num_input), dtype=jnp.float32)
    params = init_params(num_input, actions, kp)

    # One-time bf16 cast of the weights (hoisted out of the per-call path).
    prepared = prepare_params(params)

    # With batch=32 the tile heuristic picks tb=16 -> a 2-step batch grid,
    # exercising the pipelined / megacore-shardable path.
    out = qnet_forward(x, prepared)
    out = jax.block_until_ready(out)

    ref = qnet_reference(x, params)
    assert out.shape == (batch, actions)
    # bf16 MXU operands / f32 accumulation vs f32 reference -> loose-ish tolerance.
    assert jnp.allclose(out, ref, atol=5e-2, rtol=5e-2), (
        float(jnp.max(jnp.abs(out - ref))))

    print("KERNEL_OK")
</pallas_src>

<mosaic_0001>
module attributes {stable_mosaic.version = 11 : i64} {
  func.func @qnet_kernel(%arg0: i32, %arg1: memref<16x16xf32, #tpu.memory_space<vmem>>, %arg2: memref<16x128xbf16, #tpu.memory_space<vmem>>, %arg3: memref<1x128xf32, #tpu.memory_space<vmem>>, %arg4: memref<128x128xbf16, #tpu.memory_space<vmem>>, %arg5: memref<1x128xf32, #tpu.memory_space<vmem>>, %arg6: memref<128x4xbf16, #tpu.memory_space<vmem>>, %arg7: memref<1x4xf32, #tpu.memory_space<vmem>>, %arg8: memref<16x4xf32, #tpu.memory_space<vmem>>) attributes {dimension_semantics = [#tpu.dimension_semantics<parallel>], iteration_bounds = array<i64: 2>, scalar_prefetch = 0 : i64, scratch_operands = 0 : i64, tpu.core_type = #tpu.core_type<tc>, window_params = [{transform_indices = @transform_0, window_bounds = array<i64: 16, 16>}, {pipeline_mode = #tpu.pipeline_mode<synchronous>, transform_indices = @transform_1, window_bounds = array<i64: 16, 128>}, {pipeline_mode = #tpu.pipeline_mode<synchronous>, transform_indices = @transform_2, window_bounds = array<i64: 1, 128>}, {pipeline_mode = #tpu.pipeline_mode<synchronous>, transform_indices = @transform_3, window_bounds = array<i64: 128, 128>}, {pipeline_mode = #tpu.pipeline_mode<synchronous>, transform_indices = @transform_4, window_bounds = array<i64: 1, 128>}, {pipeline_mode = #tpu.pipeline_mode<synchronous>, transform_indices = @transform_5, window_bounds = array<i64: 128, 4>}, {pipeline_mode = #tpu.pipeline_mode<synchronous>, transform_indices = @transform_6, window_bounds = array<i64: 1, 4>}, {transform_indices = @transform_7, window_bounds = array<i64: 16, 4>}]} {
    %c0 = arith.constant 0 : index
    %c0_0 = arith.constant 0 : index
    %0 = vector.load %arg1[%c0, %c0_0] : memref<16x16xf32, #tpu.memory_space<vmem>>, vector<16x16xf32>
    %1 = arith.truncf %0 : vector<16x16xf32> to vector<16x16xbf16>
    %c0_1 = arith.constant 0 : index
    %c0_2 = arith.constant 0 : index
    %2 = vector.load %arg2[%c0_1, %c0_2] : memref<16x128xbf16, #tpu.memory_space<vmem>>, vector<16x128xbf16>
    %cst = arith.constant dense<0.000000e+00> : vector<16x128xf32>
    %3 = tpu.matmul %1, %2, %cst {dimension_numbers = #tpu.dot_dimension_numbers<[1], [0], [0], [1], [0, 0, 1, 1], [], []>} : vector<16x16xbf16>, vector<16x128xbf16>, vector<16x128xf32> -> vector<16x128xf32>
    %c0_3 = arith.constant 0 : index
    %c0_4 = arith.constant 0 : index
    %4 = vector.load %arg3[%c0_3, %c0_4] : memref<1x128xf32, #tpu.memory_space<vmem>>, vector<1x128xf32>
    %5 = vector.broadcast %4 : vector<1x128xf32> to vector<16x128xf32>
    %6 = arith.addf %3, %5 : vector<16x128xf32>
    %cst_5 = arith.constant 0.000000e+00 : f32
    %7 = vector.broadcast %cst_5 : f32 to vector<16x128xf32>
    %8 = arith.maximumf %6, %7 : vector<16x128xf32>
    %9 = arith.truncf %8 : vector<16x128xf32> to vector<16x128xbf16>
    %c0_6 = arith.constant 0 : index
    %c0_7 = arith.constant 0 : index
    %10 = vector.load %arg4[%c0_6, %c0_7] : memref<128x128xbf16, #tpu.memory_space<vmem>>, vector<128x128xbf16>
    %cst_8 = arith.constant dense<0.000000e+00> : vector<16x128xf32>
    %11 = tpu.matmul %9, %10, %cst_8 {dimension_numbers = #tpu.dot_dimension_numbers<[1], [0], [0], [1], [0, 0, 1, 1], [], []>} : vector<16x128xbf16>, vector<128x128xbf16>, vector<16x128xf32> -> vector<16x128xf32>
    %c0_9 = arith.constant 0 : index
    %c0_10 = arith.constant 0 : index
    %12 = vector.load %arg5[%c0_9, %c0_10] : memref<1x128xf32, #tpu.memory_space<vmem>>, vector<1x128xf32>
    %13 = vector.broadcast %12 : vector<1x128xf32> to vector<16x128xf32>
    %14 = arith.addf %11, %13 : vector<16x128xf32>
    %cst_11 = arith.constant 0.000000e+00 : f32
    %15 = vector.broadcast %cst_11 : f32 to vector<16x128xf32>
    %16 = arith.maximumf %14, %15 : vector<16x128xf32>
    %17 = arith.truncf %16 : vector<16x128xf32> to vector<16x128xbf16>
    %c0_12 = arith.constant 0 : index
    %c0_13 = arith.constant 0 : index
    %18 = vector.load %arg6[%c0_12, %c0_13] : memref<128x4xbf16, #tpu.memory_space<vmem>>, vector<128x4xbf16>
    %cst_14 = arith.constant dense<0.000000e+00> : vector<16x4xf32>
    %19 = tpu.matmul %17, %18, %cst_14 {dimension_numbers = #tpu.dot_dimension_numbers<[1], [0], [0], [1], [0, 0, 1, 1], [], []>} : vector<16x128xbf16>, vector<128x4xbf16>, vector<16x4xf32> -> vector<16x4xf32>
    %c0_15 = arith.constant 0 : index
    %c0_16 = arith.constant 0 : index
    %20 = vector.load %arg7[%c0_15, %c0_16] : memref<1x4xf32, #tpu.memory_space<vmem>>, vector<1x4xf32>
    %21 = vector.broadcast %20 : vector<1x4xf32> to vector<16x4xf32>
    %22 = arith.addf %19, %21 : vector<16x4xf32>
    %c0_17 = arith.constant 0 : index
    %c0_18 = arith.constant 0 : index
    %23 = vector.load %arg8[%c0_17, %c0_18] : memref<16x4xf32, #tpu.memory_space<vmem>>, vector<16x4xf32>
    tpu.vector_store %arg8[%c0_17, %c0_18], %22 {strides = array<i32>} : memref<16x4xf32, #tpu.memory_space<vmem>>, vector<16x4xf32>,
    return
  }
  func.func @transform_0(%arg0: i32) -> (i32, i32) {
    %c0_i32 = arith.constant 0 : i32
    %c0_i32_0 = arith.constant 0 : i32
    return %arg0, %c0_i32 : i32, i32
  }
  func.func @transform_1(%arg0: i32) -> (i32, i32) {
    %c0_i32 = arith.constant 0 : i32
    %c0_i32_0 = arith.constant 0 : i32
    %c0_i32_1 = arith.constant 0 : i32
    return %c0_i32, %c0_i32_0 : i32, i32
  }
  func.func @transform_2(%arg0: i32) -> (i32, i32) {
    %c0_i32 = arith.constant 0 : i32
    %c0_i32_0 = arith.constant 0 : i32
    %c0_i32_1 = arith.constant 0 : i32
    return %c0_i32, %c0_i32_0 : i32, i32
  }
  func.func @transform_3(%arg0: i32) -> (i32, i32) {
    %c0_i32 = arith.constant 0 : i32
    %c0_i32_0 = arith.constant 0 : i32
    %c0_i32_1 = arith.constant 0 : i32
    return %c0_i32, %c0_i32_0 : i32, i32
  }
  func.func @transform_4(%arg0: i32) -> (i32, i32) {
    %c0_i32 = arith.constant 0 : i32
    %c0_i32_0 = arith.constant 0 : i32
    %c0_i32_1 = arith.constant 0 : i32
    return %c0_i32, %c0_i32_0 : i32, i32
  }
  func.func @transform_5(%arg0: i32) -> (i32, i32) {
    %c0_i32 = arith.constant 0 : i32
    %c0_i32_0 = arith.constant 0 : i32
    %c0_i32_1 = arith.constant 0 : i32
    return %c0_i32, %c0_i32_0 : i32, i32
  }
  func.func @transform_6(%arg0: i32) -> (i32, i32) {
    %c0_i32 = arith.constant 0 : i32
    %c0_i32_0 = arith.constant 0 : i32
    %c0_i32_1 = arith.constant 0 : i32
    return %c0_i32, %c0_i32_0 : i32, i32
  }
  func.func @transform_7(%arg0: i32) -> (i32, i32) {
    %c0_i32 = arith.constant 0 : i32
    %c0_i32_0 = arith.constant 0 : i32
    return %arg0, %c0_i32 : i32, i32
  }
}

</mosaic_0001>

<llo_original>
// kernel: tpu_custom_call.1
$region0: #{tpu_custom_call.1}
  #allocation0 [shape = 'u32[]', space=smem, size = 0x4, offset = 0x4, fixed_abs, tag = 'smem constant byte address 0x4 - core index']
  #allocation1 [shape = 'u32[144,128]{1,0:T(1,128)}', space=vmem, size = 0x12000, scoped, tag = 'internal scratch']
  %s0 = inlined_call_operand.vmem [shape: f32[32,16], index: 0, kind: input, shape index: {}]
  %s1 = inlined_call_operand.vmem [shape: bf16[16,128], index: 1, kind: input, shape index: {}]
  %s2 = inlined_call_operand.vmem [shape: f32[1,128], index: 2, kind: input, shape index: {}]
  %s3 = inlined_call_operand.vmem [shape: bf16[128,128], index: 3, kind: input, shape index: {}]
  %s4 = inlined_call_operand.vmem [shape: f32[1,128], index: 4, kind: input, shape index: {}]
  %s5 = inlined_call_operand.vmem [shape: bf16[128,4], index: 5, kind: input, shape index: {}]
  %s6 = inlined_call_operand.vmem [shape: f32[1,4], index: 6, kind: input, shape index: {}]
  %s7 = inlined_call_operand.vmem [shape: f32[32,4], index: 7, kind: output, shape index: {}]
  %s8 = sld [smem:[#allocation0]]
  $region61: #{tpu_custom_call.1} parent=0
    _
  %s10 = ssub.s32 1, %s8
  %s11 = scalar_select 0, %s10, %s8
  loop: start=0, step=1, limit=4
  $region2: #{tpu_custom_call.1} parent=0 // loop_pre_header
    _
  $region3: #{tpu_custom_call.1} parent=0 // loop_header
    %s13 = sphi 0, %s17
    %p14 = scmp.ge.s32.totalorder %s13, 4
    %s23 = sphi 0, %s25
    %s26 = sphi 0, %s23
    %s27 = sphi 0, %s26
    %s43 = sphi 0, %s27
    %s47 = sphi 0, %s47
    %s49 = sphi 0, %s47
    %s50 = sphi 0, %s49
    %s64 = sphi 0, %s50
    %s68 = sphi 0, %s68
    %s70 = sphi 0, %s68
    %s71 = sphi 0, %s70
    %s85 = sphi 0, %s71
    %s89 = sphi 0, %s89
    %s91 = sphi 0, %s89
    %s92 = sphi 0, %s91
    %s106 = sphi 0, %s92
    %s110 = sphi 0, %s110
    %s112 = sphi 0, %s110
    %s113 = sphi 0, %s112
    %s127 = sphi 0, %s113
    %s131 = sphi 0, %s131
    %s133 = sphi 0, %s131
    %s134 = sphi 0, %s133
    %s148 = sphi 0, %s134
    %s152 = sphi 0, %s152
    %s154 = sphi 0, %s152
    %s155 = sphi 0, %s154
    %s169 = sphi 0, %s155
    %s175 = sphi 0, %s177
    %s178 = sphi 0, %s175
    %s179 = sphi 0, %s178
    %s195 = sphi 0, %s179
  $region4: #{tpu_custom_call.1} parent=0 // loop_header_branch
    %16 = sbr.rel (%p14) target = $region8
  $region5: #{tpu_custom_call.1} parent=0 // loop_body
    %s18 = ssub.s32 %s13, 1
    %s19 = ssub.s32 %s13, 2
    %s20 = sadd.s32 %s13, 1
    %s21 = ssub.s32 %s13, %s20
    %p22 = scmp.eq.s32.totalorder %s21, 0
    %s24 = sadd.s32 %s23, 1
    %s25 = scalar_select %p22, %s23, %s24
    %p28 = pneg %p22
    %p29 = scmp.eq.s32.totalorder %s13, 1
    %p30 = por %p28, %p29
    %p31 = scmp.ne.s32.totalorder %s23, %s26
    %p32 = scmp.eq.s32.totalorder %s13, 0
    %p33 = por %p31, %p32
    %p34 = scmp.ne.s32.totalorder %s23, %s26
    %p35 = scmp.eq.s32.totalorder %s18, 1
    %p36 = por %p34, %p35
    %p37 = scmp.ne.s32.totalorder %s26, %s27
    %p38 = scmp.eq.s32.totalorder %s18, 0
    %p39 = por %p37, %p38
    %p40 = scmp.ne.s32.totalorder %s26, %s27
    %p41 = scmp.eq.s32.totalorder %s19, 1
    %p42 = por %p40, %p41
    %p44 = scmp.ne.s32.totalorder %s27, %s43
    %p45 = scmp.eq.s32.totalorder %s19, 0
    %p46 = por %p44, %p45
    %s48 = sadd.s32 %s47, 1
    %p51 = scmp.eq.s32.totalorder %s13, 1
    %p52 = scmp.ne.s32.totalorder %s47, %s49
    %p53 = scmp.eq.s32.totalorder %s13, 0
    %p54 = por %p52, %p53
    %p55 = scmp.ne.s32.totalorder %s47, %s49
    %p56 = scmp.eq.s32.totalorder %s18, 1
    %p57 = por %p55, %p56
    %p58 = scmp.ne.s32.totalorder %s49, %s50
    %p59 = scmp.eq.s32.totalorder %s18, 0
    %p60 = por %p58, %p59
    %p61 = scmp.ne.s32.totalorder %s49, %s50
    %p62 = scmp.eq.s32.totalorder %s19, 1
    %p63 = por %p61, %p62
    %p65 = scmp.ne.s32.totalorder %s50, %s64
    %p66 = scmp.eq.s32.totalorder %s19, 0
    %p67 = por %p65, %p66
    %s69 = sadd.s32 %s68, 1
    %p72 = scmp.eq.s32.totalorder %s13, 1
    %p73 = scmp.ne.s32.totalorder %s68, %s70
    %p74 = scmp.eq.s32.totalorder %s13, 0
    %p75 = por %p73, %p74
    %p76 = scmp.ne.s32.totalorder %s68, %s70
    %p77 = scmp.eq.s32.totalorder %s18, 1
    %p78 = por %p76, %p77
    %p79 = scmp.ne.s32.totalorder %s70, %s71
    %p80 = scmp.eq.s32.totalorder %s18, 0
    %p81 = por %p79, %p80
    %p82 = scmp.ne.s32.totalorder %s70, %s71
    %p83 = scmp.eq.s32.totalorder %s19, 1
    %p84 = por %p82, %p83
    %p86 = scmp.ne.s32.totalorder %s71, %s85
    %p87 = scmp.eq.s32.totalorder %s19, 0
    %p88 = por %p86, %p87
    %s90 = sadd.s32 %s89, 1
    %p93 = scmp.eq.s32.totalorder %s13, 1
    %p94 = scmp.ne.s32.totalorder %s89, %s91
    %p95 = scmp.eq.s32.totalorder %s13, 0
    %p96 = por %p94, %p95
    %p97 = scmp.ne.s32.totalorder %s89, %s91
    %p98 = scmp.eq.s32.totalorder %s18, 1
    %p99 = por %p97, %p98
    %p100 = scmp.ne.s32.totalorder %s91, %s92
    %p101 = scmp.eq.s32.totalorder %s18, 0
    %p102 = por %p100, %p101
    %p103 = scmp.ne.s32.totalorder %s91, %s92
    %p104 = scmp.eq.s32.totalorder %s19, 1
    %p105 = por %p103, %p104
    %p107 = scmp.ne.s32.totalorder %s92, %s106
    %p108 = scmp.eq.s32.totalorder %s19, 0
    %p109 = por %p107, %p108
    %s111 = sadd.s32 %s110, 1
    %p114 = scmp.eq.s32.totalorder %s13, 1
    %p115 = scmp.ne.s32.totalorder %s110, %s112
    %p116 = scmp.eq.s32.totalorder %s13, 0
    %p117 = por %p115, %p116
    %p118 = scmp.ne.s32.totalorder %s110, %s112
    %p119 = scmp.eq.s32.totalorder %s18, 1
    %p120 = por %p118, %p119
    %p121 = scmp.ne.s32.totalorder %s112, %s113
    %p122 = scmp.eq.s32.totalorder %s18, 0
    %p123 = por %p121, %p122
    %p124 = scmp.ne.s32.totalorder %s112, %s113
    %p125 = scmp.eq.s32.totalorder %s19, 1
    %p126 = por %p124, %p125
    %p128 = scmp.ne.s32.totalorder %s113, %s127
    %p129 = scmp.eq.s32.totalorder %s19, 0
    %p130 = por %p128, %p129
    %s132 = sadd.s32 %s131, 1
    %p135 = scmp.eq.s32.totalorder %s13, 1
    %p136 = scmp.ne.s32.totalorder %s131, %s133
    %p137 = scmp.eq.s32.totalorder %s13, 0
    %p138 = por %p136, %p137
    %p139 = scmp.ne.s32.totalorder %s131, %s133
    %p140 = scmp.eq.s32.totalorder %s18, 1
    %p141 = por %p139, %p140
    %p142 = scmp.ne.s32.totalorder %s133, %s134
    %p143 = scmp.eq.s32.totalorder %s18, 0
    %p144 = por %p142, %p143
    %p145 = scmp.ne.s32.totalorder %s133, %s134
    %p146 = scmp.eq.s32.totalorder %s19, 1
    %p147 = por %p145, %p146
    %p149 = scmp.ne.s32.totalorder %s134, %s148
    %p150 = scmp.eq.s32.totalorder %s19, 0
    %p151 = por %p149, %p150
    %s153 = sadd.s32 %s152, 1
    %p156 = scmp.eq.s32.totalorder %s13, 1
    %p157 = scmp.ne.s32.totalorder %s152, %s154
    %p158 = scmp.eq.s32.totalorder %s13, 0
    %p159 = por %p157, %p158
    %p160 = scmp.ne.s32.totalorder %s152, %s154
    %p161 = scmp.eq.s32.totalorder %s18, 1
    %p162 = por %p160, %p161
    %p163 = scmp.ne.s32.totalorder %s154, %s155
    %p164 = scmp.eq.s32.totalorder %s18, 0
    %p165 = por %p163, %p164
    %p166 = scmp.ne.s32.totalorder %s154, %s155
    %p167 = scmp.eq.s32.totalorder %s19, 1
    %p168 = por %p166, %p167
    %p170 = scmp.ne.s32.totalorder %s155, %s169
    %p171 = scmp.eq.s32.totalorder %s19, 0
    %p172 = por %p170, %p171
    %s173 = ssub.s32 %s13, %s20
    %p174 = scmp.eq.s32.totalorder %s173, 0
    %s176 = sadd.s32 %s175, 1
    %s177 = scalar_select %p174, %s175, %s176
    %p180 = pneg %p174
    %p181 = scmp.eq.s32.totalorder %s13, 1
    %p182 = por %p180, %p181
    %p183 = scmp.ne.s32.totalorder %s175, %s178
    %p184 = scmp.eq.s32.totalorder %s13, 0
    %p185 = por %p183, %p184
    %p186 = scmp.ne.s32.totalorder %s175, %s178
    %p187 = scmp.eq.s32.totalorder %s18, 1
    %p188 = por %p186, %p187
    %p189 = scmp.ne.s32.totalorder %s178, %s179
    %p190 = scmp.eq.s32.totalorder %s18, 0
    %p191 = por %p189, %p190
    %p192 = scmp.ne.s32.totalorder %s178, %s179
    %p193 = scmp.eq.s32.totalorder %s19, 1
    %p194 = por %p192, %p193
    %p196 = scmp.ne.s32.totalorder %s179, %s195
    %p197 = scmp.eq.s32.totalorder %s19, 0
    %p198 = por %p196, %p197
    %p199 = scmp.le.s32.totalorder 1, %s13
    %p200 = scmp.lt.s32.totalorder %s13, 3
    %p201 = pnand %p199, %p200
    %p202 = pneg %p201
    // Predicated region
    $region9: #{tpu_custom_call.1} parent=5 // pred_check
      _
    $region10: #{tpu_custom_call.1} parent=5 // pred_check_branch
      %204 = sbr.rel (%p201) target = $region12
    $region11: #{tpu_custom_call.1} parent=5 // pred_region
      %s205 = ssub.s32 %s13, 1
      // Predicated region
      $region13: #{tpu_custom_call.1} parent=11 // pred_check
        %p206 = pneg %p60
      $region14: #{tpu_custom_call.1} parent=11 // pred_check_branch
        %208 = sbr.rel (%p206) target = $region16
      $region15: #{tpu_custom_call.1} parent=11 // pred_region
        _
      $region16: #{tpu_custom_call.1} parent=11 // pred_fallthru
        _
      // Predicated region
      $region17: #{tpu_custom_call.1} parent=11 // pred_check
        %p209 = pneg %p81
      $region18: #{tpu_custom_call.1} parent=11 // pred_check_branch
        %211 = sbr.rel (%p209) target = $region20
      $region19: #{tpu_custom_call.1} parent=11 // pred_region
        _
      $region20: #{tpu_custom_call.1} parent=11 // pred_fallthru
        _
      // Predicated region
      $region21: #{tpu_custom_call.1} parent=11 // pred_check
        %p212 = pneg %p102
      $region22: #{tpu_custom_call.1} parent=11 // pred_check_branch
        %214 = sbr.rel (%p212) target = $region24
      $region23: #{tpu_custom_call.1} parent=11 // pred_region
        _
      $region24: #{tpu_custom_call.1} parent=11 // pred_fallthru
        _
      // Predicated region
      $region25: #{tpu_custom_call.1} parent=11 // pred_check
        %p215 = pneg %p123
      $region26: #{tpu_custom_call.1} parent=11 // pred_check_branch
        %217 = sbr.rel (%p215) target = $region28
      $region27: #{tpu_custom_call.1} parent=11 // pred_region
        _
      $region28: #{tpu_custom_call.1} parent=11 // pred_fallthru
        _
      // Predicated region
      $region29: #{tpu_custom_call.1} parent=11 // pred_check
        %p218 = pneg %p144
      $region30: #{tpu_custom_call.1} parent=11 // pred_check_branch
        %220 = sbr.rel (%p218) target = $region32
      $region31: #{tpu_custom_call.1} parent=11 // pred_region
        _
      $region32: #{tpu_custom_call.1} parent=11 // pred_fallthru
        _
      // Predicated region
      $region33: #{tpu_custom_call.1} parent=11 // pred_check
        %p221 = pneg %p165
      $region34: #{tpu_custom_call.1} parent=11 // pred_check_branch
        %223 = sbr.rel (%p221) target = $region36
      $region35: #{tpu_custom_call.1} parent=11 // pred_region
        _
      $region36: #{tpu_custom_call.1} parent=11 // pred_fallthru
        _
    $region12: #{tpu_custom_call.1} parent=5 // pred_fallthru
      _
    %p224 = scmp.lt.s32.totalorder %s13, 2
    // Predicated region
    $region37: #{tpu_custom_call.1} parent=5 // pred_check
      %p225 = pneg %p224
    $region38: #{tpu_custom_call.1} parent=5 // pred_check_branch
      %227 = sbr.rel (%p225) target = $region40
    $region39: #{tpu_custom_call.1} parent=5 // pred_region
      // Predicated region
      $region41: #{tpu_custom_call.1} parent=39 // pred_check
        %p228 = pneg %p33
      $region42: #{tpu_custom_call.1} parent=39 // pred_check_branch
        %230 = sbr.rel (%p228) target = $region44
      $region43: #{tpu_custom_call.1} parent=39 // pred_region
        %s231 = smul.u32 2, %s13
        %p232 = scmp.lt.s32.totalorder %s231, 3
        %s233 = scalar_select %p232, %s231, 3
        %s234 = smul.addr %s233, 8
        %s235 = scalar_lea.vmem %s0, %s234
        %s236 = smul.u32 2, %s13
      $region44: #{tpu_custom_call.1} parent=39 // pred_fallthru
        _
    $region40: #{tpu_custom_call.1} parent=5 // pred_fallthru
      _
    %p237 = scmp.le.s32.totalorder 1, %s13
    %p238 = scmp.lt.s32.totalorder %s13, 3
    %p239 = pnand %p237, %p238
    %p240 = pneg %p239
    // Predicated region
    $region45: #{tpu_custom_call.1} parent=5 // pred_check
      _
    $region46: #{tpu_custom_call.1} parent=5 // pred_check_branch
      %242 = sbr.rel (%p239) target = $region48
    $region47: #{tpu_custom_call.1} parent=5 // pred_region
      %s243 = ssub.s32 %s13, 1
      %s244 = smul.u32 2, %s18
      %p245 = scmp.lt.s32.totalorder %s244, 3
      %s246 = scalar_select %p245, %s244, 3
      %s247 = smul.addr %s246, 8
      %s248 = scalar_lea.vmem %s0, %s247
      %p249 = pneg %p39
      %p250 = pneg %p36
      %p251 = pneg %p60
      %p252 = pneg %p57
      %p253 = pneg %p81
      %p254 = pneg %p78
      %p255 = pneg %p102
      %p256 = pneg %p99
      %p257 = pneg %p123
      %p258 = pneg %p120
      %p259 = pneg %p144
      %p260 = pneg %p141
      %p261 = pneg %p165
      %p262 = pneg %p162
      %p263 = pneg %p191
      %p264 = pneg %p188
      %s265 = smul.u32 2, %s18
      %p266 = scmp.lt.s32.totalorder %s265, 3
      %s267 = scalar_select %p266, %s265, 3
      %s268 = smul.addr %s267, 8
      %s269 = scalar_lea.vmem %s7, %s268
      %s270 = smul.u32 2, %s18
      %p271 = scmp.lt.s32.totalorder %s270, 3
      %s272 = scalar_select %p271, %s270, 3
      %s273 = smul.addr %s272, 8
      %s274 = scalar_lea.vmem %s0, %s273
      %s275 = smul.u32 2, %s18
      %s276 = smul.u32 2, %s18
      %p277 = scmp.lt.s32.totalorder %s276, 3
      %s278 = scalar_select %p277, %s276, 3
      %s279 = smul.addr %s278, 8
      %s280 = scalar_lea.vmem %s7, %s279
      %s281 = smul.u32 2, %s18
      %v283 = vld [vmem:[%s274] sm:$0xff]
      %v284 = vld [vmem:[%s274 + $0x8] sm:$0xff]
      %v285 = vpack.c.bf16 %v284, %v283
      %v286 = vld [vmem:[%s1] sm:$0xf]
      %v287 = vld [vmem:[%s1 + $0x4] sm:$0xf]
      %v288 = vld [vmem:[%s2] sm:$0x1]
      %v290 = vlaneseq
      %v291 = vshrl.u32 %v290, 7
      %v292 = vsub.s32 0, %v291
      %v293 = vrot.slane %v288, %v292
      %v297 = vunpack.c.l.b16 %v286
      %v298 = vunpack.c.l.b16 %v287
      %v299 = vpack.c.b16 %v298, %v297
      %vm301 = vcmask 130048
      %v303 = vsel %vm301, %v285, 0
      %305 = vmatprep.subr.bf16.mxu0 0
      %306 = vmatpush1.bf16.msra.mxu0 0
      %307 = vmatprep.subr.bf16.mxu0 0
      %308 = vmatpush1.bf16.msra.mxu0 0
      %309 = vmatprep.subr.bf16.mxu0 0
      %310 = vmatpush1.bf16.msra.mxu0 0
      %311 = vmatprep.subr.bf16.mxu0 0
      %312 = vmatpush1.bf16.msra.mxu0 0
      %313 = vmatprep.subr.bf16.mxu0 0
      %314 = vmatpush1.bf16.msra.mxu0 0
      %315 = vmatprep.subr.bf16.mxu0 0
      %316 = vmatpush1.bf16.msra.mxu0 0
      %317 = vmatprep.subr.bf16.mxu0 0
      %318 = vmatpush1.bf16.msra.mxu0 0
      %319 = vmatprep.subr.bf16.mxu0 0
      %320 = vmatpush1.bf16.msra.mxu0 %v299
      %321 = vmatprep.subr.bf16.mxu0 0
      %322 = vmatpush2.bf16.msra.mxu0 0
      %323 = vmatprep.subr.bf16.mxu0 0
      %324 = vmatpush2.bf16.msra.mxu0 0
      %325 = vmatprep.subr.bf16.mxu0 0
      %326 = vmatpush2.bf16.msra.mxu0 0
      %327 = vmatprep.subr.bf16.mxu0 0
      %328 = vmatpush2.bf16.msra.mxu0 0
      %329 = vmatprep.subr.bf16.mxu0 0
      %330 = vmatpush2.bf16.msra.mxu0 0
      %331 = vmatprep.subr.bf16.mxu0 0
      %332 = vmatpush2.bf16.msra.mxu0 0
      %333 = vmatprep.subr.bf16.mxu0 0
      %334 = vmatpush2.bf16.msra.mxu0 0
      %335 = vmatprep.subr.bf16.mxu0 0
      %336 = vmatpush2.bf16.msra.mxu0 0
      %337 = vmatprep.mubr.bf16.mxu0 0
      %338 = vmatmul.mubr.bf16.gmra.mxu0 %v303
      %v339 = vpop.f32.mrf.mxu0
      %v340 = vadd.f32 %v293, %v339
      %v341 = vpop.f32.mrf.mxu0
      %v342 = vpop.f32.mrf.mxu0
      %v343 = vadd.f32 %v293, %v342
      %v344 = vpop.f32.mrf.mxu0
      %345 = vdwg.mxu0
      %v346 = vmax.f32 %v340, 0.0
      %v347 = vmax.f32 %v343, 0.0
      %v348 = vpack.c.bf16 %v347, %v346
      %v349 = vld [vmem:[%s3] sm:$0xf]
      %v350 = vld [vmem:[%s3 + $0x4] sm:$0xf]
      %v351 = vld [vmem:[%s3 + $0x8] sm:$0xf]
      %v352 = vld [vmem:[%s3 + $0xc] sm:$0xf]
      %v353 = vld [vmem:[%s3 + $0x10] sm:$0xf]
      %v354 = vld [vmem:[%s3 + $0x14] sm:$0xf]
      %v355 = vld [vmem:[%s3 + $0x18] sm:$0xf]
      %v356 = vld [vmem:[%s3 + $0x1c] sm:$0xf]
      %v357 = vld [vmem:[%s3 + $0x20] sm:$0xf]
      %v358 = vld [vmem:[%s3 + $0x24] sm:$0xf]
      %v359 = vld [vmem:[%s3 + $0x28] sm:$0xf]
      %v360 = vld [vmem:[%s3 + $0x2c] sm:$0xf]
      %v361 = vld [vmem:[%s3 + $0x30] sm:$0xf]
      %v362 = vld [vmem:[%s3 + $0x34] sm:$0xf]
      %v363 = vld [vmem:[%s3 + $0x38] sm:$0xf]
      %v364 = vld [vmem:[%s3 + $0x3c] sm:$0xf]
      %v365 = vld [vmem:[%s4] sm:$0x1]
      %v367 = vlaneseq
      %v368 = vshrl.u32 %v367, 7
      %v369 = vsub.s32 0, %v368
      %v370 = vrot.slane %v365, %v369
      %v388 = vunpack.c.l.b16 %v349
      %v389 = vunpack.c.l.b16 %v350
      %v390 = vunpack.c.l.b16 %v351
      %v391 = vunpack.c.l.b16 %v352
      %v392 = vunpack.c.l.b16 %v353
      %v393 = vunpack.c.l.b16 %v354
      %v394 = vunpack.c.l.b16 %v355
      %v395 = vunpack.c.l.b16 %v356
      %v396 = vunpack.c.l.b16 %v357
      %v397 = vunpack.c.l.b16 %v358
      %v398 = vunpack.c.l.b16 %v359
      %v399 = vunpack.c.l.b16 %v360
      %v400 = vunpack.c.l.b16 %v361
      %v401 = vunpack.c.l.b16 %v362
      %v402 = vunpack.c.l.b16 %v363
      %v403 = vunpack.c.l.b16 %v364
      %v404 = vpack.c.b16 %v389, %v388
      %v405 = vpack.c.b16 %v391, %v390
      %v406 = vpack.c.b16 %v393, %v392
      %v407 = vpack.c.b16 %v395, %v394
      %v408 = vpack.c.b16 %v397, %v396
      %v409 = vpack.c.b16 %v399, %v398
      %v410 = vpack.c.b16 %v401, %v400
      %v411 = vpack.c.b16 %v403, %v402
      %420 = vmatprep.subr.bf16.mxu0 0
      %421 = vmatpush1.bf16.msra.mxu0 %v411
      %422 = vmatprep.subr.bf16.mxu0 0
      %423 = vmatpush1.bf16.msra.mxu0 %v410
      %424 = vmatprep.subr.bf16.mxu0 0
      %425 = vmatpush1.bf16.msra.mxu0 %v409
      %426 = vmatprep.subr.bf16.mxu0 0
      %427 = vmatpush1.bf16.msra.mxu0 %v408
      %428 = vmatprep.subr.bf16.mxu0 0
      %429 = vmatpush1.bf16.msra.mxu0 %v407
      %430 = vmatprep.subr.bf16.mxu0 0
      %431 = vmatpush1.bf16.msra.mxu0 %v406
      %432 = vmatprep.subr.bf16.mxu0 0
      %433 = vmatpush1.bf16.msra.mxu0 %v405
      %434 = vmatprep.subr.bf16.mxu0 0
      %435 = vmatpush1.bf16.msra.mxu0 %v404
      %436 = vmatprep.subr.bf16.mxu0 0
      %437 = vmatpush2.bf16.msra.mxu0 0
      %438 = vmatprep.subr.bf16.mxu0 0
      %439 = vmatpush2.bf16.msra.mxu0 0
      %440 = vmatprep.subr.bf16.mxu0 0
      %441 = vmatpush2.bf16.msra.mxu0 0
      %442 = vmatprep.subr.bf16.mxu0 0
      %443 = vmatpush2.bf16.msra.mxu0 0
      %444 = vmatprep.subr.bf16.mxu0 0
      %445 = vmatpush2.bf16.msra.mxu0 0
      %446 = vmatprep.subr.bf16.mxu0 0
      %447 = vmatpush2.bf16.msra.mxu0 0
      %448 = vmatprep.subr.bf16.mxu0 0
      %449 = vmatpush2.bf16.msra.mxu0 0
      %450 = vmatprep.subr.bf16.mxu0 0
      %451 = vmatpush2.bf16.msra.mxu0 0
      %452 = vmatprep.mubr.bf16.mxu0 0
      %453 = vmatmul.mubr.bf16.gmra.mxu0 %v348
      %v454 = vpop.f32.mrf.mxu0
      %v455 = vadd.f32 %v370, %v454
      %v456 = vpop.f32.mrf.mxu0
      %v457 = vpop.f32.mrf.mxu0
      %v458 = vadd.f32 %v370, %v457
      %v459 = vpop.f32.mrf.mxu0
      %460 = vdwg.mxu0
      %v461 = vmax.f32 %v455, 0.0
      %v462 = vmax.f32 %v458, 0.0
      %v463 = vpack.c.bf16 %v462, %v461
      %v464 = vld [vmem:[%s5] sm:$0xf]
      %v465 = vld [vmem:[%s5 + $0x4] sm:$0xf]
      %v466 = vld [vmem:[%s5 + $0x8] sm:$0xf]
      %v467 = vld [vmem:[%s5 + $0xc] sm:$0xf]
      %v468 = vld [vmem:[%s5 + $0x10] sm:$0xf]
      %v469 = vld [vmem:[%s5 + $0x14] sm:$0xf]
      %v470 = vld [vmem:[%s5 + $0x18] sm:$0xf]
      %v471 = vld [vmem:[%s5 + $0x1c] sm:$0xf]
      %v472 = vld [vmem:[%s5 + $0x20] sm:$0xf]
      %v473 = vld [vmem:[%s5 + $0x24] sm:$0xf]
      %v474 = vld [vmem:[%s5 + $0x28] sm:$0xf]
      %v475 = vld [vmem:[%s5 + $0x2c] sm:$0xf]
      %v476 = vld [vmem:[%s5 + $0x30] sm:$0xf]
      %v477 = vld [vmem:[%s5 + $0x34] sm:$0xf]
      %v478 = vld [vmem:[%s5 + $0x38] sm:$0xf]
      %v479 = vld [vmem:[%s5 + $0x3c] sm:$0xf]
      %v480 = vld [vmem:[%s6] sm:$0x1]
      %v482 = vlaneseq
      %v483 = vshrl.u32 %v482, 7
      %v484 = vsub.s32 0, %v483
      %v485 = vrot.slane %v480, %v484
      %v503 = vunpack.c.l.b16 %v464
      %v504 = vunpack.c.l.b16 %v465
      %v505 = vunpack.c.l.b16 %v466
      %v506 = vunpack.c.l.b16 %v467
      %v507 = vunpack.c.l.b16 %v468
      %v508 = vunpack.c.l.b16 %v469
      %v509 = vunpack.c.l.b16 %v470
      %v510 = vunpack.c.l.b16 %v471
      %v511 = vunpack.c.l.b16 %v472
      %v512 = vunpack.c.l.b16 %v473
      %v513 = vunpack.c.l.b16 %v474
      %v514 = vunpack.c.l.b16 %v475
      %v515 = vunpack.c.l.b16 %v476
      %v516 = vunpack.c.l.b16 %v477
      %v517 = vunpack.c.l.b16 %v478
      %v518 = vunpack.c.l.b16 %v479
      %v519 = vpack.c.b16 %v504, %v503
      %v520 = vpack.c.b16 %v506, %v505
      %v521 = vpack.c.b16 %v508, %v507
      %v522 = vpack.c.b16 %v510, %v509
      %v523 = vpack.c.b16 %v512, %v511
      %v524 = vpack.c.b16 %v514, %v513
      %v525 = vpack.c.b16 %v516, %v515
      %v526 = vpack.c.b16 %v518, %v517
      %535 = vmatprep.subr.bf16.mxu0 0
      %536 = vmatpush1.bf16.msra.mxu0 %v526
      %537 = vmatprep.subr.bf16.mxu0 0
      %538 = vmatpush1.bf16.msra.mxu0 %v525
      %539 = vmatprep.subr.bf16.mxu0 0
      %540 = vmatpush1.bf16.msra.mxu0 %v524
      %541 = vmatprep.subr.bf16.mxu0 0
      %542 = vmatpush1.bf16.msra.mxu0 %v523
      %543 = vmatprep.subr.bf16.mxu0 0
      %544 = vmatpush1.bf16.msra.mxu0 %v522
      %545 = vmatprep.subr.bf16.mxu0 0
      %546 = vmatpush1.bf16.msra.mxu0 %v521
      %547 = vmatprep.subr.bf16.mxu0 0
      %548 = vmatpush1.bf16.msra.mxu0 %v520
      %549 = vmatprep.subr.bf16.mxu0 0
      %550 = vmatpush1.bf16.msra.mxu0 %v519
      %551 = vmatprep.subr.bf16.mxu0 0
      %552 = vmatpush2.bf16.msra.mxu0 0
      %553 = vmatprep.subr.bf16.mxu0 0
      %554 = vmatpush2.bf16.msra.mxu0 0
      %555 = vmatprep.subr.bf16.mxu0 0
      %556 = vmatpush2.bf16.msra.mxu0 0
      %557 = vmatprep.subr.bf16.mxu0 0
      %558 = vmatpush2.bf16.msra.mxu0 0
      %559 = vmatprep.subr.bf16.mxu0 0
      %560 = vmatpush2.bf16.msra.mxu0 0
      %561 = vmatprep.subr.bf16.mxu0 0
      %562 = vmatpush2.bf16.msra.mxu0 0
      %563 = vmatprep.subr.bf16.mxu0 0
      %564 = vmatpush2.bf16.msra.mxu0 0
      %565 = vmatprep.subr.bf16.mxu0 0
      %566 = vmatpush2.bf16.msra.mxu0 0
      %567 = vmatprep.mubr.bf16.mxu0 0
      %568 = vmatmul.mubr.bf16.gmra.mxu0 %v463
      %v569 = vpop.f32.mrf.mxu0
      %v570 = vadd.f32 %v485, %v569
      %v571 = vpop.f32.mrf.mxu0
      %v572 = vpop.f32.mrf.mxu0
      %v573 = vadd.f32 %v485, %v572
      %v574 = vpop.f32.mrf.mxu0
      %575 = vdwg.mxu0
      %vm576 = vcmask 31744
      %577 = vst.msk [vmem:[%s280] sm:$0xff] %vm576, %v570
      %578 = vst.msk [vmem:[%s280 + $0x8] sm:$0xff] %vm576, %v573
      %s579 = smul.u32 2, %s18
      %p580 = scmp.lt.s32.totalorder %s579, 3
      %s581 = scalar_select %p580, %s579, 3
      %s582 = smul.addr %s581, 8
      %s583 = scalar_lea.vmem %s7, %s582
      // Predicated region
      $region49: #{tpu_custom_call.1} parent=47 // pred_check
        %p584 = pneg %p188
      $region50: #{tpu_custom_call.1} parent=47 // pred_check_branch
        %586 = sbr.rel (%p584) target = $region52
      $region51: #{tpu_custom_call.1} parent=47 // pred_region
        %s587 = smul.u32 2, %s18
      $region52: #{tpu_custom_call.1} parent=47 // pred_fallthru
        _
    $region48: #{tpu_custom_call.1} parent=5 // pred_fallthru
      _
    %p588 = scmp.le.s32.totalorder 2, %s13
    // Predicated region
    $region53: #{tpu_custom_call.1} parent=5 // pred_check
      %p589 = pneg %p588
    $region54: #{tpu_custom_call.1} parent=5 // pred_check_branch
      %591 = sbr.rel (%p589) target = $region56
    $region55: #{tpu_custom_call.1} parent=5 // pred_region
      %s592 = ssub.s32 %s13, 2
      // Predicated region
      $region57: #{tpu_custom_call.1} parent=55 // pred_check
        %p593 = pneg %p194
      $region58: #{tpu_custom_call.1} parent=55 // pred_check_branch
        %595 = sbr.rel (%p593) target = $region60
      $region59: #{tpu_custom_call.1} parent=55 // pred_region
        %s596 = smul.u32 2, %s19
        %p597 = scmp.lt.s32.totalorder %s596, 3
        %s598 = scalar_select %p597, %s596, 3
        %s599 = smul.addr %s598, 8
        %s600 = scalar_lea.vmem %s7, %s599
      $region60: #{tpu_custom_call.1} parent=55 // pred_fallthru
        _
    $region56: #{tpu_custom_call.1} parent=5 // pred_fallthru
      _
  $region6: #{tpu_custom_call.1} parent=0 // loop_footer
    %s17 = sadd.s32 1, %s13
  $region7: #{tpu_custom_call.1} parent=0 // loop_footer_branch
    %12 = sbr.rel target = $region3
  $region8: #{tpu_custom_call.1} parent=0 // loop_exit
    _

</llo_original>
